<compile_context>
chip_gen: v7x
topology: tpu7x:2x2x1
jax: 0.10.0
libtpu: 0.0.40
codegen_flags: <defaults>
</compile_context>

<pallas_src>
import functools

import jax
import jax.numpy as jnp
from jax.experimental import pallas as pl
from jax.experimental.pallas import tpu as pltpu

_MiB = 1024 * 1024


def _round_up(x, m):
    return ((x + m - 1) // m) * m


def _detect_tpu_config():
    """Per-generation tile defaults. Never raises."""
    kind = ""
    try:
        kind = jax.devices()[0].device_kind.lower()
    except Exception:
        pass
    vmem_cap = None
    try:
        vmem_cap = int(pltpu.get_tpu_info().vmem_capacity_bytes)
    except Exception:
        pass

    is_v7 = ("v7" in kind) or ("7x" in kind)
    is_v6 = ("v6" in kind) or ("6e" in kind)
    is_v5e = ("v5e" in kind) or ("v5 lite" in kind) or ("v5lite" in kind)

    if not (is_v7 or is_v6 or is_v5e) and vmem_cap is not None:
        if vmem_cap <= 80 * _MiB:
            is_v7 = True  # small-VMEM generation: size like v7x

    if is_v7:
        # 64 MiB VMEM/TC, ridge ~300 FLOP/byte, 2 TensorCores per chip.
        return dict(tm=512, tn=256, vmem_budget=48 * _MiB, two_tc=True)
    if is_v6:
        # 128 MiB VMEM, ridge ~700 FLOP/byte -> large token tiles.
        return dict(tm=1024, tn=512, vmem_budget=96 * _MiB, two_tc=False)
    if is_v5e:
        # 128 MiB VMEM, ridge ~240 FLOP/byte -> tm=256 is already balanced.
        return dict(tm=256, tn=512, vmem_budget=96 * _MiB, two_tc=False)
    # Unknown generation: conservative sizes that fit a 64 MiB-VMEM chip.
    return dict(tm=512, tn=256, vmem_budget=48 * _MiB, two_tc=False)


def _required_vmem_bytes(tm, tn, dim, x_bytes, w_bytes, out_bytes):
    xb = 2 * tm * dim * x_bytes          # double-buffered x tiles
    w13 = 2 * dim * 2 * tn * w_bytes     # double-buffered fused [w1|w3] tiles
    w2 = 2 * tn * dim * w_bytes          # double-buffered w2 tiles
    ob = 2 * tm * dim * out_bytes        # double-buffered output tiles
    acc = tm * dim * 4                   # f32 accumulator scratch
    tmp = tm * 2 * tn * 4 + tm * tn * 4  # h (f32) + silu/g temporaries
    return xb + w13 + w2 + ob + acc + tmp


def _fit_tm(tm, tn, dim, x_bytes, w_bytes, out_bytes, budget):
    tm = max(8, _round_up(tm, 8))
    while tm > 8 and _required_vmem_bytes(tm, tn, dim, x_bytes, w_bytes,
                                          out_bytes) > budget:
        tm = max(8, _round_up(tm // 2, 8))
    return tm


def _ffn_kernel(x_ref, w13_ref, w2_ref, o_ref, acc_ref, *, tn):
    # x_ref:   (tm, dim)          tile of tokens (bf16 hot path)
    # w13_ref: (1, dim, 2*tn)     fused [w1_k | w3_k] slab (contiguous in HBM)
    # w2_ref:  (tn, dim)          slice of the down proj
    # o_ref:   (tm, dim)          output tile (resident across reduction axis)
    # acc_ref: (tm, dim) f32      VMEM accumulator scratch
    k = pl.program_id(1)

    x = x_ref[...]
    w13 = w13_ref[0]
    # One fused MXU pass produces [h1 | h3] for this inter slice.
    h = jnp.dot(x, w13, preferred_element_type=jnp.float32)  # (tm, 2*tn)
    h1 = h[:, :tn]
    h3 = h[:, tn:]
    # silu(h1) * h3, with the reciprocal pushed onto the EUP slot.
    sig = pl.reciprocal(1.0 + jnp.exp(-h1), approx=True)
    g = (h1 * sig) * h3
    update = jnp.dot(g.astype(w2_ref.dtype), w2_ref[...],
                     preferred_element_type=jnp.float32)

    @pl.when(k == 0)
    def _first():
        acc_ref[...] = update            # no zero-fill + read-modify-write

    @pl.when(k > 0)
    def _rest():
        acc_ref[...] += update

    @pl.when(k == pl.num_programs(1) - 1)
    def _finalize():
        o_ref[...] = acc_ref[...].astype(o_ref.dtype)


def pack_ffn_weights(w1, w3, w2, *, tn=None, compute_dtype=jnp.bfloat16):
    """Pre-pack PyTorch-layout weights. Call ONCE outside the hot path.

    w1, w3: (inter, dim); w2: (dim, inter)
    Returns (w13t, w2t, tn_eff):
      w13t: (kt, dim, 2*tn_eff)  -- slab k holds [w1_k.T | w3_k.T] contiguously
      w2t : (inter_pad, dim)     -- w2.T, inter padded to a tile multiple
    """
    inter, dim = w1.shape
    if tn is None:
        tn = _detect_tpu_config()["tn"]
    # Keep tn a lane-tile multiple (128) so the h[:, :tn]/h[:, tn:] split lands
    # on a 128-lane boundary (no relayout copies) and MXU passes stay full.
    tn_eff = min(tn, _round_up(inter, 128))
    tn_eff = _round_up(tn_eff, 128)
    assert tn_eff % 128 == 0
    inter_pad = _round_up(inter, tn_eff)
    kt = inter_pad // tn_eff

    def pad_inter(w):  # (inter, dim) -> (inter_pad, dim); zero rows contribute 0
        return jnp.pad(w, ((0, inter_pad - inter), (0, 0)))

    w1t = pad_inter(w1).T.astype(compute_dtype)  # (dim, inter_pad)
    w3t = pad_inter(w3).T.astype(compute_dtype)  # (dim, inter_pad)
    # (kt, dim, 2*tn): each k-slab is a fully contiguous HBM DMA of [w1_k|w3_k].
    w13t = jnp.concatenate(
        [w1t.reshape(dim, kt, tn_eff), w3t.reshape(dim, kt, tn_eff)],
        axis=-1,
    ).transpose(1, 0, 2)

    w2t = jnp.pad(w2, ((0, 0), (0, inter_pad - inter))).T.astype(compute_dtype)
    return w13t, w2t, tn_eff


def feed_forward(x, w13t, w2t, tn, *, tm=None, vmem_limit_bytes=None):
    """x: (B, S, dim); (w13t, w2t, tn) from pack_ffn_weights."""
    B, S, dim = x.shape
    kt, dim_w, two_tn = w13t.shape
    assert dim_w == dim and two_tn == 2 * tn
    inter_pad = w2t.shape[0]
    assert inter_pad == kt * tn
    T = B * S

    cfg = _detect_tpu_config()
    if tm is None:
        tm = cfg["tm"]
    budget = vmem_limit_bytes if vmem_limit_bytes is not None else cfg["vmem_budget"]

    compute_dtype = w13t.dtype
    x_bytes = jnp.dtype(compute_dtype).itemsize
    w_bytes = jnp.dtype(w13t.dtype).itemsize
    out_bytes = jnp.dtype(x.dtype).itemsize

    # Token tile: at most `tm`, at least a multiple of 8.
    tm_eff = min(tm, _round_up(T, 8))
    # On 2-TC chips (v7x) guarantee >=2 token tiles so both cores get work.
    if cfg["two_tc"] and T > 64:
        tm_eff = min(tm_eff, _round_up(pl.cdiv(T, 2), 8))
    # Shrink tm until the tile working set fits the per-generation VMEM budget.
    tm_eff = _fit_tm(tm_eff, tn, dim, x_bytes, w_bytes, out_bytes, budget)

    T_pad = _round_up(T, tm_eff)
    x2d = x.reshape(T, dim).astype(compute_dtype)
    if T_pad != T:
        x2d = jnp.pad(x2d, ((0, T_pad - T), (0, 0)))

    n_token_tiles = T_pad // tm_eff
    grid = (n_token_tiles, kt)

    w_itemsize = jnp.dtype(w13t.dtype).itemsize
    cost = pl.CostEstimate(
        flops=6 * T_pad * dim * inter_pad,
        transcendentals=T_pad * inter_pad,
        bytes_accessed=(T_pad * dim * (x_bytes + out_bytes)
                        + n_token_tiles * (w13t.size + w2t.size) * w_itemsize),
    )

    out2d = pl.pallas_call(
        functools.partial(_ffn_kernel, tn=tn),
        out_shape=jax.ShapeDtypeStruct((T_pad, dim), x.dtype),
        grid_spec=pltpu.PrefetchScalarGridSpec(
            num_scalar_prefetch=0,
            grid=grid,
            in_specs=[
                pl.BlockSpec((tm_eff, dim), lambda i, k: (i, 0)),
                pl.BlockSpec((1, dim, 2 * tn), lambda i, k: (k, 0, 0)),
                pl.BlockSpec((tn, dim), lambda i, k: (k, 0)),
            ],
            out_specs=pl.BlockSpec((tm_eff, dim), lambda i, k: (i, 0)),
            scratch_shapes=[pltpu.VMEM((tm_eff, dim), jnp.float32)],
        ),
        compiler_params=pltpu.CompilerParams(
            dimension_semantics=("parallel", "arbitrary"),
            vmem_limit_bytes=int(budget),
        ),
        cost_estimate=cost,
    )(x2d, w13t, w2t)

    return out2d[:T].reshape(B, S, dim)


def feed_forward_ref(x, w1, w3, w2):
    h1 = jnp.einsum("bsd,id->bsi", x, w1)
    h3 = jnp.einsum("bsd,id->bsi", x, w3)
    g = jax.nn.silu(h1) * h3
    return jnp.einsum("bsi,di->bsd", g, w2)


def _assert_close(out, ref, tol, name):
    out = out.astype(jnp.float32)
    err = float(jnp.max(jnp.abs(out - ref)))
    scale = float(jnp.max(jnp.abs(ref))) + 1e-6
    assert err / scale < tol, f"{name}: rel err {err / scale:.4f} > {tol}"


if __name__ == "__main__":
    key = jax.random.PRNGKey(0)

    # --- Test 1: small shapes consistent with the module (single grid step) ---
    B, S, dim, inter = 2, 8, 128, 256
    kx, k1, k3, k2 = jax.random.split(key, 4)
    x = jax.random.normal(kx, (B, S, dim), dtype=jnp.float32)
    w1 = jax.random.normal(k1, (inter, dim), dtype=jnp.float32) * 0.02
    w3 = jax.random.normal(k3, (inter, dim), dtype=jnp.float32) * 0.02
    w2 = jax.random.normal(k2, (dim, inter), dtype=jnp.float32) * 0.02

    w13t, w2t, tn = pack_ffn_weights(w1, w3, w2)         # bf16 hot path
    out = feed_forward(x, w13t, w2t, tn)
    jax.block_until_ready(out)
    ref = feed_forward_ref(x, w1, w3, w2)
    assert out.shape == (B, S, dim)
    _assert_close(out, ref, 0.03, "test 1 (bf16 kernel vs f32 ref)")

    # --- Test 2: multiple token tiles and multiple inter-reduction steps ---
    B2, S2, dim2, inter2 = 2, 128, 256, 1024
    kx2, k12, k32, k22 = jax.random.split(jax.random.PRNGKey(1), 4)
    x2 = jax.random.normal(kx2, (B2, S2, dim2), dtype=jnp.float32)
    w1b = jax.random.normal(k12, (inter2, dim2), dtype=jnp.float32) * 0.02
    w3b = jax.random.normal(k32, (inter2, dim2), dtype=jnp.float32) * 0.02
    w2b = jax.random.normal(k22, (dim2, inter2), dtype=jnp.float32) * 0.02

    w13t2, w2t2, tn2 = pack_ffn_weights(w1b, w3b, w2b, tn=256)
    out2 = feed_forward(x2, w13t2, w2t2, tn2, tm=128)  # grid = (2 token tiles, 4 k steps)
    jax.block_until_ready(out2)
    ref2 = feed_forward_ref(x2, w1b, w3b, w2b)
    assert out2.shape == (B2, S2, dim2)
    _assert_close(out2, ref2, 0.03, "test 2 (bf16 kernel vs f32 ref)")

    print("KERNEL_OK")
</pallas_src>

<mosaic_0001>
module attributes {stable_mosaic.version = 11 : i64} {
  func.func @_ffn_kernel(%arg0: i32, %arg1: i32, %arg2: memref<16x128xbf16, #tpu.memory_space<vmem>>, %arg3: memref<1x128x512xbf16, #tpu.memory_space<vmem>>, %arg4: memref<256x128xbf16, #tpu.memory_space<vmem>>, %arg5: memref<16x128xf32, #tpu.memory_space<vmem>>, %arg6: memref<16x128xf32, #tpu.memory_space<vmem>>) attributes {dimension_semantics = [#tpu.dimension_semantics<parallel>, #tpu.dimension_semantics<arbitrary>], iteration_bounds = array<i64: 1, 1>, scalar_prefetch = 0 : i64, scratch_operands = 1 : i64, tpu.core_type = #tpu.core_type<tc>, window_params = [{transform_indices = @transform_0, window_bounds = array<i64: 16, 128>}, {transform_indices = @transform_1, window_bounds = array<i64: 1, 128, 512>}, {transform_indices = @transform_2, window_bounds = array<i64: 256, 128>}, {transform_indices = @transform_3, window_bounds = array<i64: 16, 128>}]} {
    %c0 = arith.constant 0 : index
    %c0_0 = arith.constant 0 : index
    %0 = vector.load %arg2[%c0, %c0_0] : memref<16x128xbf16, #tpu.memory_space<vmem>>, vector<16x128xbf16>
    %c0_1 = arith.constant 0 : index
    %c0_2 = arith.constant 0 : index
    %c0_3 = arith.constant 0 : index
    %1 = vector.load %arg3[%c0_1, %c0_2, %c0_3] : memref<1x128x512xbf16, #tpu.memory_space<vmem>>, vector<1x128x512xbf16>
    %2 = vector.shape_cast %1 : vector<1x128x512xbf16> to vector<128x512xbf16>
    %cst = arith.constant dense<0.000000e+00> : vector<16x512xf32>
    %3 = tpu.matmul %0, %2, %cst {dimension_numbers = #tpu.dot_dimension_numbers<[1], [0], [0], [1], [0, 0, 1, 1], [], []>} : vector<16x128xbf16>, vector<128x512xbf16>, vector<16x512xf32> -> vector<16x512xf32>
    %4 = vector.extract_strided_slice %3 {offsets = [0, 0], sizes = [16, 256], strides = [1, 1]} : vector<16x512xf32> to vector<16x256xf32>
    %5 = vector.extract_strided_slice %3 {offsets = [0, 256], sizes = [16, 256], strides = [1, 1]} : vector<16x512xf32> to vector<16x256xf32>
    %cst_4 = arith.constant 0.000000e+00 : f32
    %6 = vector.broadcast %cst_4 : f32 to vector<16x256xf32>
    %7 = arith.subf %6, %4 : vector<16x256xf32>
    %8 = math.exp %7 : vector<16x256xf32>
    %cst_5 = arith.constant 1.000000e+00 : f32
    %9 = vector.broadcast %cst_5 : f32 to vector<16x256xf32>
    %10 = arith.addf %9, %8 : vector<16x256xf32>
    %11 = tpu.reciprocal %10 {approx = true} : vector<16x256xf32> -> vector<16x256xf32>
    %12 = arith.mulf %4, %11 : vector<16x256xf32>
    %13 = arith.mulf %12, %5 : vector<16x256xf32>
    %14 = arith.truncf %13 : vector<16x256xf32> to vector<16x256xbf16>
    %c0_6 = arith.constant 0 : index
    %c0_7 = arith.constant 0 : index
    %15 = vector.load %arg4[%c0_6, %c0_7] : memref<256x128xbf16, #tpu.memory_space<vmem>>, vector<256x128xbf16>
    %cst_8 = arith.constant dense<0.000000e+00> : vector<16x128xf32>
    %16 = tpu.matmul %14, %15, %cst_8 {dimension_numbers = #tpu.dot_dimension_numbers<[1], [0], [0], [1], [0, 0, 1, 1], [], []>} : vector<16x256xbf16>, vector<256x128xbf16>, vector<16x128xf32> -> vector<16x128xf32>
    %c0_i32 = arith.constant 0 : i32
    %17 = arith.cmpi eq, %arg1, %c0_i32 : i32
    %18 = arith.extui %17 : i1 to i32
    %c0_i32_9 = arith.constant 0 : i32
    %19 = arith.cmpi ne, %18, %c0_i32_9 : i32
    scf.if %19 {
      %c0_14 = arith.constant 0 : index
      %c0_15 = arith.constant 0 : index
      %26 = vector.load %arg6[%c0_14, %c0_15] : memref<16x128xf32, #tpu.memory_space<vmem>>, vector<16x128xf32>
      tpu.vector_store %arg6[%c0_14, %c0_15], %16 {strides = array<i32>} : memref<16x128xf32, #tpu.memory_space<vmem>>, vector<16x128xf32>,
    } else {
    }
    %c0_i32_10 = arith.constant 0 : i32
    %20 = arith.cmpi sgt, %arg1, %c0_i32_10 : i32
    %21 = arith.extui %20 : i1 to i32
    %c0_i32_11 = arith.constant 0 : i32
    %22 = arith.cmpi ne, %21, %c0_i32_11 : i32
    scf.if %22 {
      %c0_14 = arith.constant 0 : index
      %c0_15 = arith.constant 0 : index
      %26 = vector.load %arg6[%c0_14, %c0_15] : memref<16x128xf32, #tpu.memory_space<vmem>>, vector<16x128xf32>
      %27 = arith.addf %26, %16 : vector<16x128xf32>
      %c0_16 = arith.constant 0 : index
      %c0_17 = arith.constant 0 : index
      %28 = vector.load %arg6[%c0_16, %c0_17] : memref<16x128xf32, #tpu.memory_space<vmem>>, vector<16x128xf32>
      tpu.vector_store %arg6[%c0_16, %c0_17], %27 {strides = array<i32>} : memref<16x128xf32, #tpu.memory_space<vmem>>, vector<16x128xf32>,
    } else {
    }
    %c0_i32_12 = arith.constant 0 : i32
    %23 = arith.cmpi eq, %arg1, %c0_i32_12 : i32
    %24 = arith.extui %23 : i1 to i32
    %c0_i32_13 = arith.constant 0 : i32
    %25 = arith.cmpi ne, %24, %c0_i32_13 : i32
    scf.if %25 {
      %c0_14 = arith.constant 0 : index
      %c0_15 = arith.constant 0 : index
      %26 = vector.load %arg6[%c0_14, %c0_15] : memref<16x128xf32, #tpu.memory_space<vmem>>, vector<16x128xf32>
      %c0_16 = arith.constant 0 : index
      %c0_17 = arith.constant 0 : index
      %27 = vector.load %arg5[%c0_16, %c0_17] : memref<16x128xf32, #tpu.memory_space<vmem>>, vector<16x128xf32>
      tpu.vector_store %arg5[%c0_16, %c0_17], %26 {strides = array<i32>} : memref<16x128xf32, #tpu.memory_space<vmem>>, vector<16x128xf32>,
    } else {
    }
    return
  }
  func.func @transform_0(%arg0: i32, %arg1: i32) -> (i32, i32) {
    %c0_i32 = arith.constant 0 : i32
    %c0_i32_0 = arith.constant 0 : i32
    return %arg0, %c0_i32 : i32, i32
  }
  func.func @transform_1(%arg0: i32, %arg1: i32) -> (i32, i32, i32) {
    %c0_i32 = arith.constant 0 : i32
    %c0_i32_0 = arith.constant 0 : i32
    %c0_i32_1 = arith.constant 0 : i32
    return %arg1, %c0_i32, %c0_i32_0 : i32, i32, i32
  }
  func.func @transform_2(%arg0: i32, %arg1: i32) -> (i32, i32) {
    %c0_i32 = arith.constant 0 : i32
    %c0_i32_0 = arith.constant 0 : i32
    return %arg1, %c0_i32 : i32, i32
  }
  func.func @transform_3(%arg0: i32, %arg1: i32) -> (i32, i32) {
    %c0_i32 = arith.constant 0 : i32
    %c0_i32_0 = arith.constant 0 : i32
    return %arg0, %c0_i32 : i32, i32
  }
}

</mosaic_0001>

<llo_original>
// kernel: tpu_custom_call.1
$region0: #{tpu_custom_call.1}
  #allocation0 [shape = 'u32[]', space=smem, size = 0x4, offset = 0x4, fixed_abs, tag = 'smem constant byte address 0x4 - core index']
  #allocation1 [shape = 'u32[144,128]{1,0:T(1,128)}', space=vmem, size = 0x12000, scoped, tag = 'internal scratch']
  #allocation2 [shape = 'f32[16,128]{1,0:T(8,128)}', space=vmem, size = 0x2000, scoped, tag = 'scratch operand']
  %s0 = inlined_call_operand.hbm [shape: bf16[16,128], index: 0, kind: input, shape index: {}]
  %s1 = inlined_call_operand.hbm [shape: bf16[1,128,512], index: 1, kind: input, shape index: {}]
  %s2 = inlined_call_operand.hbm [shape: bf16[256,128], index: 2, kind: input, shape index: {}]
  %s3 = inlined_call_operand.hbm [shape: f32[16,128], index: 3, kind: output, shape index: {}]
  %s4 = sld [smem:[#allocation0]]
  $region46: #{tpu_custom_call.1} parent=0
    _
  %s6 = ssub.s32 1, %s4
  %s7 = scalar_select 0, %s6, %s4
  $region1: #{tpu_custom_call.1} parent=0
    #allocation3 [shape = 'u8[4096]{0}', space=vmem, size = 0x1000, scoped, tag = 'input window, operand 0, single buffered']
    #allocation4 [shape = 's32[1]{0}', space=sflag, size = 0x4, scoped, tag = 'scoped memory for tpu_custom_call.1']
    #allocation5 [shape = 's32[1]{0}', space=sflag, size = 0x4, scoped, tag = 'scoped memory for tpu_custom_call.1']
    #allocation6 [shape = 'u8[131072]{0}', space=vmem, size = 0x20000, scoped, tag = 'input window, operand 1, single buffered']
    #allocation7 [shape = 's32[1]{0}', space=sflag, size = 0x4, scoped, tag = 'scoped memory for tpu_custom_call.1']
    #allocation8 [shape = 'u8[65536]{0}', space=vmem, size = 0x10000, scoped, tag = 'input window, operand 2, single buffered']
    #allocation9 [shape = 'u8[8192]{0}', space=vmem, size = 0x2000, scoped, tag = 'output window, operand 0, single buffered']
    %8 = vsyncpa [#allocation4], 0
    %9 = vsyncpa [#allocation7], 0
    %10 = vsyncpa [#allocation5], 0
    // Predicated region
    $region2: #{tpu_custom_call.1} parent=1 // pred_check
      _
    $region3: #{tpu_custom_call.1} parent=1 // pred_check_branch
      %12 = sbr.rel (0) target = $region5
    $region4: #{tpu_custom_call.1} parent=1 // pred_region
      %s14 = ssub.s32 128, 128
      %15 = vsyncadd [#allocation4], %s14
      %s16 = sshll.u32 [#allocation3], 4
      %s17 = int_to_ptr.vmem [resolvable:$true] %s16
      %22 = dma.hbm_to_vmem [thread:$0]  %s0, 128, %s17, [#allocation4], 64, 64, 4
    $region5: #{tpu_custom_call.1} parent=1 // pred_fallthru
      _
    // Predicated region
    $region6: #{tpu_custom_call.1} parent=1 // pred_check
      _
    $region7: #{tpu_custom_call.1} parent=1 // pred_check_branch
      %24 = sbr.rel (0) target = $region9
    $region8: #{tpu_custom_call.1} parent=1 // pred_region
      %s26 = ssub.s32 4096, 4096
      %27 = vsyncadd [#allocation7], %s26
      %s28 = sshll.u32 [#allocation6], 4
      %s29 = int_to_ptr.vmem [resolvable:$true] %s28
      %34 = dma.hbm_to_vmem [thread:$0]  %s1, 4096, %s29, [#allocation7], 256, 256, 16
    $region9: #{tpu_custom_call.1} parent=1 // pred_fallthru
      _
    // Predicated region
    $region10: #{tpu_custom_call.1} parent=1 // pred_check
      _
    $region11: #{tpu_custom_call.1} parent=1 // pred_check_branch
      %36 = sbr.rel (0) target = $region13
    $region12: #{tpu_custom_call.1} parent=1 // pred_region
      %s38 = ssub.s32 2048, 2048
      %39 = vsyncadd [#allocation7], %s38
      %s40 = sshll.u32 [#allocation8], 4
      %s41 = int_to_ptr.vmem [resolvable:$true] %s40
      %46 = dma.hbm_to_vmem [thread:$0]  %s2, 2048, %s41, [#allocation7], 64, 64, 4
    $region13: #{tpu_custom_call.1} parent=1 // pred_fallthru
      _
    // Predicated region
    $region14: #{tpu_custom_call.1} parent=1 // pred_check
      _
    $region15: #{tpu_custom_call.1} parent=1 // pred_check_branch
      %48 = sbr.rel (0) target = $region17
    $region16: #{tpu_custom_call.1} parent=1 // pred_region
      %49 = dma.done [#allocation4], 128
    $region17: #{tpu_custom_call.1} parent=1 // pred_fallthru
      _
    // Predicated region
    $region18: #{tpu_custom_call.1} parent=1 // pred_check
      _
    $region19: #{tpu_custom_call.1} parent=1 // pred_check_branch
      %51 = sbr.rel (0) target = $region21
    $region20: #{tpu_custom_call.1} parent=1 // pred_region
      %52 = dma.done [#allocation7], 4096
    $region21: #{tpu_custom_call.1} parent=1 // pred_fallthru
      _
    // Predicated region
    $region22: #{tpu_custom_call.1} parent=1 // pred_check
      _
    $region23: #{tpu_custom_call.1} parent=1 // pred_check_branch
      %54 = sbr.rel (0) target = $region25
    $region24: #{tpu_custom_call.1} parent=1 // pred_region
      %55 = dma.done [#allocation7], 2048
    $region25: #{tpu_custom_call.1} parent=1 // pred_fallthru
      _
    %v57 = vld [vmem:[#allocation3] sm:$0xf]
    %v58 = vld [vmem:[#allocation3 + $0x4] sm:$0xf]
    %v59 = vld [vmem:[#allocation6] sm:$0xff]
    %v60 = vld [vmem:[#allocation6 + $0x8] sm:$0xff]
    %v61 = vld [vmem:[#allocation6 + $0x10] sm:$0xff]
    %v62 = vld [vmem:[#allocation6 + $0x18] sm:$0xff]
    %v63 = vld [vmem:[#allocation6 + $0x20] sm:$0xff]
    %v64 = vld [vmem:[#allocation6 + $0x28] sm:$0xff]
    %v65 = vld [vmem:[#allocation6 + $0x30] sm:$0xff]
    %v66 = vld [vmem:[#allocation6 + $0x38] sm:$0xff]
    %v67 = vld [vmem:[#allocation6 + $0x40] sm:$0xff]
    %v68 = vld [vmem:[#allocation6 + $0x48] sm:$0xff]
    %v69 = vld [vmem:[#allocation6 + $0x50] sm:$0xff]
    %v70 = vld [vmem:[#allocation6 + $0x58] sm:$0xff]
    %v71 = vld [vmem:[#allocation6 + $0x60] sm:$0xff]
    %v72 = vld [vmem:[#allocation6 + $0x68] sm:$0xff]
    %v73 = vld [vmem:[#allocation6 + $0x70] sm:$0xff]
    %v74 = vld [vmem:[#allocation6 + $0x78] sm:$0xff]
    %v75 = vld [vmem:[#allocation6 + $0x80] sm:$0xff]
    %v76 = vld [vmem:[#allocation6 + $0x88] sm:$0xff]
    %v77 = vld [vmem:[#allocation6 + $0x90] sm:$0xff]
    %v78 = vld [vmem:[#allocation6 + $0x98] sm:$0xff]
    %v79 = vld [vmem:[#allocation6 + $0xa0] sm:$0xff]
    %v80 = vld [vmem:[#allocation6 + $0xa8] sm:$0xff]
    %v81 = vld [vmem:[#allocation6 + $0xb0] sm:$0xff]
    %v82 = vld [vmem:[#allocation6 + $0xb8] sm:$0xff]
    %v83 = vld [vmem:[#allocation6 + $0xc0] sm:$0xff]
    %v84 = vld [vmem:[#allocation6 + $0xc8] sm:$0xff]
    %v85 = vld [vmem:[#allocation6 + $0xd0] sm:$0xff]
    %v86 = vld [vmem:[#allocation6 + $0xd8] sm:$0xff]
    %v87 = vld [vmem:[#allocation6 + $0xe0] sm:$0xff]
    %v88 = vld [vmem:[#allocation6 + $0xe8] sm:$0xff]
    %v89 = vld [vmem:[#allocation6 + $0xf0] sm:$0xff]
    %v90 = vld [vmem:[#allocation6 + $0xf8] sm:$0xff]
    %v93 = vunpack.c.l.b16 %v57
    %v94 = vunpack.c.l.b16 %v58
    %v95 = vpack.c.b16 %v94, %v93
    %v129 = vunpack.c.l.b16 %v59
    %v130 = vunpack.c.h.b16 %v59
    %v131 = vunpack.c.l.b16 %v60
    %v132 = vunpack.c.h.b16 %v60
    %v133 = vunpack.c.l.b16 %v61
    %v134 = vunpack.c.h.b16 %v61
    %v135 = vunpack.c.l.b16 %v62
    %v136 = vunpack.c.h.b16 %v62
    %v137 = vunpack.c.l.b16 %v63
    %v138 = vunpack.c.h.b16 %v63
    %v139 = vunpack.c.l.b16 %v64
    %v140 = vunpack.c.h.b16 %v64
    %v141 = vunpack.c.l.b16 %v65
    %v142 = vunpack.c.h.b16 %v65
    %v143 = vunpack.c.l.b16 %v66
    %v144 = vunpack.c.h.b16 %v66
    %v145 = vunpack.c.l.b16 %v67
    %v146 = vunpack.c.h.b16 %v67
    %v147 = vunpack.c.l.b16 %v68
    %v148 = vunpack.c.h.b16 %v68
    %v149 = vunpack.c.l.b16 %v69
    %v150 = vunpack.c.h.b16 %v69
    %v151 = vunpack.c.l.b16 %v70
    %v152 = vunpack.c.h.b16 %v70
    %v153 = vunpack.c.l.b16 %v71
    %v154 = vunpack.c.h.b16 %v71
    %v155 = vunpack.c.l.b16 %v72
    %v156 = vunpack.c.h.b16 %v72
    %v157 = vunpack.c.l.b16 %v73
    %v158 = vunpack.c.h.b16 %v73
    %v159 = vunpack.c.l.b16 %v74
    %v160 = vunpack.c.h.b16 %v74
    %v161 = vunpack.c.l.b16 %v75
    %v162 = vunpack.c.h.b16 %v75
    %v163 = vunpack.c.l.b16 %v76
    %v164 = vunpack.c.h.b16 %v76
    %v165 = vunpack.c.l.b16 %v77
    %v166 = vunpack.c.h.b16 %v77
    %v167 = vunpack.c.l.b16 %v78
    %v168 = vunpack.c.h.b16 %v78
    %v169 = vunpack.c.l.b16 %v79
    %v170 = vunpack.c.h.b16 %v79
    %v171 = vunpack.c.l.b16 %v80
    %v172 = vunpack.c.h.b16 %v80
    %v173 = vunpack.c.l.b16 %v81
    %v174 = vunpack.c.h.b16 %v81
    %v175 = vunpack.c.l.b16 %v82
    %v176 = vunpack.c.h.b16 %v82
    %v177 = vunpack.c.l.b16 %v83
    %v178 = vunpack.c.h.b16 %v83
    %v179 = vunpack.c.l.b16 %v84
    %v180 = vunpack.c.h.b16 %v84
    %v181 = vunpack.c.l.b16 %v85
    %v182 = vunpack.c.h.b16 %v85
    %v183 = vunpack.c.l.b16 %v86
    %v184 = vunpack.c.h.b16 %v86
    %v185 = vunpack.c.l.b16 %v87
    %v186 = vunpack.c.h.b16 %v87
    %v187 = vunpack.c.l.b16 %v88
    %v188 = vunpack.c.h.b16 %v88
    %v189 = vunpack.c.l.b16 %v89
    %v190 = vunpack.c.h.b16 %v89
    %v191 = vunpack.c.l.b16 %v90
    %v192 = vunpack.c.h.b16 %v90
    %v193 = vpack.c.b16 %v133, %v129
    %v194 = vpack.c.b16 %v134, %v130
    %v195 = vpack.c.b16 %v135, %v131
    %v196 = vpack.c.b16 %v136, %v132
    %v197 = vpack.c.b16 %v141, %v137
    %v198 = vpack.c.b16 %v142, %v138
    %v199 = vpack.c.b16 %v143, %v139
    %v200 = vpack.c.b16 %v144, %v140
    %v201 = vpack.c.b16 %v149, %v145
    %v202 = vpack.c.b16 %v150, %v146
    %v203 = vpack.c.b16 %v151, %v147
    %v204 = vpack.c.b16 %v152, %v148
    %v205 = vpack.c.b16 %v157, %v153
    %v206 = vpack.c.b16 %v158, %v154
    %v207 = vpack.c.b16 %v159, %v155
    %v208 = vpack.c.b16 %v160, %v156
    %v209 = vpack.c.b16 %v165, %v161
    %v210 = vpack.c.b16 %v166, %v162
    %v211 = vpack.c.b16 %v167, %v163
    %v212 = vpack.c.b16 %v168, %v164
    %v213 = vpack.c.b16 %v173, %v169
    %v214 = vpack.c.b16 %v174, %v170
    %v215 = vpack.c.b16 %v175, %v171
    %v216 = vpack.c.b16 %v176, %v172
    %v217 = vpack.c.b16 %v181, %v177
    %v218 = vpack.c.b16 %v182, %v178
    %v219 = vpack.c.b16 %v183, %v179
    %v220 = vpack.c.b16 %v184, %v180
    %v221 = vpack.c.b16 %v189, %v185
    %v222 = vpack.c.b16 %v190, %v186
    %v223 = vpack.c.b16 %v191, %v187
    %v224 = vpack.c.b16 %v192, %v188
    %257 = vmatprep.subr.bf16.mxu0 %v194
    %258 = vmatpush1.bf16.msra.mxu0 %v193
    %259 = vmatprep.subr.bf16.mxu0 %v198
    %260 = vmatpush1.bf16.msra.mxu0 %v197
    %261 = vmatprep.subr.bf16.mxu0 %v202
    %262 = vmatpush1.bf16.msra.mxu0 %v201
    %263 = vmatprep.subr.bf16.mxu0 %v206
    %264 = vmatpush1.bf16.msra.mxu0 %v205
    %265 = vmatprep.subr.bf16.mxu0 %v210
    %266 = vmatpush1.bf16.msra.mxu0 %v209
    %267 = vmatprep.subr.bf16.mxu0 %v214
    %268 = vmatpush1.bf16.msra.mxu0 %v213
    %269 = vmatprep.subr.bf16.mxu0 %v218
    %270 = vmatpush1.bf16.msra.mxu0 %v217
    %271 = vmatprep.subr.bf16.mxu0 %v222
    %272 = vmatpush1.bf16.msra.mxu0 %v221
    %273 = vmatprep.subr.bf16.mxu0 0
    %274 = vmatpush1.bf16.msra.mxu0 0
    %275 = vmatprep.subr.bf16.mxu0 0
    %276 = vmatpush1.bf16.msra.mxu0 0
    %277 = vmatprep.subr.bf16.mxu0 0
    %278 = vmatpush1.bf16.msra.mxu0 0
    %279 = vmatprep.subr.bf16.mxu0 0
    %280 = vmatpush1.bf16.msra.mxu0 0
    %281 = vmatprep.subr.bf16.mxu0 0
    %282 = vmatpush1.bf16.msra.mxu0 0
    %283 = vmatprep.subr.bf16.mxu0 0
    %284 = vmatpush1.bf16.msra.mxu0 0
    %285 = vmatprep.subr.bf16.mxu0 0
    %286 = vmatpush1.bf16.msra.mxu0 0
    %287 = vmatprep.subr.bf16.mxu0 0
    %288 = vmatpush1.bf16.msra.mxu0 0
    %289 = vmatprep.mubr.bf16.mxu0 0
    %290 = vmatmul.mubr.bf16.gmra.mrb[0].mxu0 %v95
    %v291 = vpop.f32.mrb[0].mxu0
    %v292 = vadd.f32 0.0, %v291
    %v293 = vpop.f32.mrb[0].mxu0
    %v294 = vadd.f32 0.0, %v293
    %v295 = vpop.f32.mrb[0].mxu0
    %v296 = vadd.f32 0.0, %v295
    %v297 = vpop.f32.mrb[0].mxu0
    %v298 = vadd.f32 0.0, %v297
    %299 = vdwg.mxu0
    %300 = vmatprep.subr.bf16.mxu0 %v196
    %301 = vmatpush1.bf16.msra.mxu0 %v195
    %302 = vmatprep.subr.bf16.mxu0 %v200
    %303 = vmatpush1.bf16.msra.mxu0 %v199
    %304 = vmatprep.subr.bf16.mxu0 %v204
    %305 = vmatpush1.bf16.msra.mxu0 %v203
    %306 = vmatprep.subr.bf16.mxu0 %v208
    %307 = vmatpush1.bf16.msra.mxu0 %v207
    %308 = vmatprep.subr.bf16.mxu0 %v212
    %309 = vmatpush1.bf16.msra.mxu0 %v211
    %310 = vmatprep.subr.bf16.mxu0 %v216
    %311 = vmatpush1.bf16.msra.mxu0 %v215
    %312 = vmatprep.subr.bf16.mxu0 %v220
    %313 = vmatpush1.bf16.msra.mxu0 %v219
    %314 = vmatprep.subr.bf16.mxu0 %v224
    %315 = vmatpush1.bf16.msra.mxu0 %v223
    %316 = vmatprep.subr.bf16.mxu0 0
    %317 = vmatpush1.bf16.msra.mxu0 0
    %318 = vmatprep.subr.bf16.mxu0 0
    %319 = vmatpush1.bf16.msra.mxu0 0
    %320 = vmatprep.subr.bf16.mxu0 0
    %321 = vmatpush1.bf16.msra.mxu0 0
    %322 = vmatprep.subr.bf16.mxu0 0
    %323 = vmatpush1.bf16.msra.mxu0 0
    %324 = vmatprep.subr.bf16.mxu0 0
    %325 = vmatpush1.bf16.msra.mxu0 0
    %326 = vmatprep.subr.bf16.mxu0 0
    %327 = vmatpush1.bf16.msra.mxu0 0
    %328 = vmatprep.subr.bf16.mxu0 0
    %329 = vmatpush1.bf16.msra.mxu0 0
    %330 = vmatprep.subr.bf16.mxu0 0
    %331 = vmatpush1.bf16.msra.mxu0 0
    %332 = vmatprep.mubr.bf16.mxu0 0
    %333 = vmatmul.mubr.bf16.gmra.mrb[0].mxu0 %v95
    %v334 = vpop.f32.mrb[0].mxu0
    %v335 = vadd.f32 0.0, %v334
    %v336 = vpop.f32.mrb[0].mxu0
    %v337 = vadd.f32 0.0, %v336
    %v338 = vpop.f32.mrb[0].mxu0
    %v339 = vadd.f32 0.0, %v338
    %v340 = vpop.f32.mrb[0].mxu0
    %v341 = vadd.f32 0.0, %v340
    %342 = vdwg.mxu0
    %v343 = vsub.f32 0.0, %v292
    %v344 = vsub.f32 0.0, %v294
    %v345 = vsub.f32 0.0, %v296
    %v346 = vsub.f32 0.0, %v298
    %v347 = vmul.f32 %v343, 1.442695
    %v348 = vpow.pop %v347
    %v349 = vmul.f32 %v344, 1.442695
    %v350 = vpow.pop %v349
    %v351 = vmul.f32 %v345, 1.442695
    %v352 = vpow.pop %v351
    %v353 = vmul.f32 %v346, 1.442695
    %v354 = vpow.pop %v353
    %v355 = vadd.f32 %v348, 1.0
    %v356 = vadd.f32 %v350, 1.0
    %v357 = vadd.f32 %v352, 1.0
    %v358 = vadd.f32 %v354, 1.0
    %v359 = vrcp.pop %v355
    %v360 = vrcp.pop %v356
    %v361 = vrcp.pop %v357
    %v362 = vrcp.pop %v358
    %v363 = vmul.f32 %v292, %v359
    %v364 = vmul.f32 %v294, %v360
    %v365 = vmul.f32 %v296, %v361
    %v366 = vmul.f32 %v298, %v362
    %v367 = vmul.f32 %v363, %v335
    %v368 = vmul.f32 %v364, %v337
    %v369 = vmul.f32 %v365, %v339
    %v370 = vmul.f32 %v366, %v341
    %v371 = vpack.c.bf16 %v369, %v367
    %v372 = vpack.c.bf16 %v370, %v368
    %v373 = vld [vmem:[#allocation8] sm:$0xf]
    %v374 = vld [vmem:[#allocation8 + $0x4] sm:$0xf]
    %v375 = vld [vmem:[#allocation8 + $0x8] sm:$0xf]
    %v376 = vld [vmem:[#allocation8 + $0xc] sm:$0xf]
    %v377 = vld [vmem:[#allocation8 + $0x10] sm:$0xf]
    %v378 = vld [vmem:[#allocation8 + $0x14] sm:$0xf]
    %v379 = vld [vmem:[#allocation8 + $0x18] sm:$0xf]
    %v380 = vld [vmem:[#allocation8 + $0x1c] sm:$0xf]
    %v381 = vld [vmem:[#allocation8 + $0x20] sm:$0xf]
    %v382 = vld [vmem:[#allocation8 + $0x24] sm:$0xf]
    %v383 = vld [vmem:[#allocation8 + $0x28] sm:$0xf]
    %v384 = vld [vmem:[#allocation8 + $0x2c] sm:$0xf]
    %v385 = vld [vmem:[#allocation8 + $0x30] sm:$0xf]
    %v386 = vld [vmem:[#allocation8 + $0x34] sm:$0xf]
    %v387 = vld [vmem:[#allocation8 + $0x38] sm:$0xf]
    %v388 = vld [vmem:[#allocation8 + $0x3c] sm:$0xf]
    %v389 = vld [vmem:[#allocation8 + $0x40] sm:$0xf]
    %v390 = vld [vmem:[#allocation8 + $0x44] sm:$0xf]
    %v391 = vld [vmem:[#allocation8 + $0x48] sm:$0xf]
    %v392 = vld [vmem:[#allocation8 + $0x4c] sm:$0xf]
    %v393 = vld [vmem:[#allocation8 + $0x50] sm:$0xf]
    %v394 = vld [vmem:[#allocation8 + $0x54] sm:$0xf]
    %v395 = vld [vmem:[#allocation8 + $0x58] sm:$0xf]
    %v396 = vld [vmem:[#allocation8 + $0x5c] sm:$0xf]
    %v397 = vld [vmem:[#allocation8 + $0x60] sm:$0xf]
    %v398 = vld [vmem:[#allocation8 + $0x64] sm:$0xf]
    %v399 = vld [vmem:[#allocation8 + $0x68] sm:$0xf]
    %v400 = vld [vmem:[#allocation8 + $0x6c] sm:$0xf]
    %v401 = vld [vmem:[#allocation8 + $0x70] sm:$0xf]
    %v402 = vld [vmem:[#allocation8 + $0x74] sm:$0xf]
    %v403 = vld [vmem:[#allocation8 + $0x78] sm:$0xf]
    %v404 = vld [vmem:[#allocation8 + $0x7c] sm:$0xf]
    %v437 = vunpack.c.l.b16 %v373
    %v438 = vunpack.c.l.b16 %v374
    %v439 = vunpack.c.l.b16 %v375
    %v440 = vunpack.c.l.b16 %v376
    %v441 = vunpack.c.l.b16 %v377
    %v442 = vunpack.c.l.b16 %v378
    %v443 = vunpack.c.l.b16 %v379
    %v444 = vunpack.c.l.b16 %v380
    %v445 = vunpack.c.l.b16 %v381
    %v446 = vunpack.c.l.b16 %v382
    %v447 = vunpack.c.l.b16 %v383
    %v448 = vunpack.c.l.b16 %v384
    %v449 = vunpack.c.l.b16 %v385
    %v450 = vunpack.c.l.b16 %v386
    %v451 = vunpack.c.l.b16 %v387
    %v452 = vunpack.c.l.b16 %v388
    %v453 = vunpack.c.l.b16 %v389
    %v454 = vunpack.c.l.b16 %v390
    %v455 = vunpack.c.l.b16 %v391
    %v456 = vunpack.c.l.b16 %v392
    %v457 = vunpack.c.l.b16 %v393
    %v458 = vunpack.c.l.b16 %v394
    %v459 = vunpack.c.l.b16 %v395
    %v460 = vunpack.c.l.b16 %v396
    %v461 = vunpack.c.l.b16 %v397
    %v462 = vunpack.c.l.b16 %v398
    %v463 = vunpack.c.l.b16 %v399
    %v464 = vunpack.c.l.b16 %v400
    %v465 = vunpack.c.l.b16 %v401
    %v466 = vunpack.c.l.b16 %v402
    %v467 = vunpack.c.l.b16 %v403
    %v468 = vunpack.c.l.b16 %v404
    %v469 = vpack.c.b16 %v438, %v437
    %v470 = vpack.c.b16 %v440, %v439
    %v471 = vpack.c.b16 %v442, %v441
    %v472 = vpack.c.b16 %v444, %v443
    %v473 = vpack.c.b16 %v446, %v445
    %v474 = vpack.c.b16 %v448, %v447
    %v475 = vpack.c.b16 %v450, %v449
    %v476 = vpack.c.b16 %v452, %v451
    %v477 = vpack.c.b16 %v454, %v453
    %v478 = vpack.c.b16 %v456, %v455
    %v479 = vpack.c.b16 %v458, %v457
    %v480 = vpack.c.b16 %v460, %v459
    %v481 = vpack.c.b16 %v462, %v461
    %v482 = vpack.c.b16 %v464, %v463
    %v483 = vpack.c.b16 %v466, %v465
    %v484 = vpack.c.b16 %v468, %v467
    %501 = vmatprep.subr.bf16.mxu0 0
    %502 = vmatpush1.bf16.msra.mxu0 %v469
    %503 = vmatprep.subr.bf16.mxu0 0
    %504 = vmatpush1.bf16.msra.mxu0 %v470
    %505 = vmatprep.subr.bf16.mxu0 0
    %506 = vmatpush1.bf16.msra.mxu0 %v471
    %507 = vmatprep.subr.bf16.mxu0 0
    %508 = vmatpush1.bf16.msra.mxu0 %v472
    %509 = vmatprep.subr.bf16.mxu0 0
    %510 = vmatpush1.bf16.msra.mxu0 %v473
    %511 = vmatprep.subr.bf16.mxu0 0
    %512 = vmatpush1.bf16.msra.mxu0 %v474
    %513 = vmatprep.subr.bf16.mxu0 0
    %514 = vmatpush1.bf16.msra.mxu0 %v475
    %515 = vmatprep.subr.bf16.mxu0 0
    %516 = vmatpush1.bf16.msra.mxu0 %v476
    %517 = vmatprep.subr.bf16.mxu0 0
    %518 = vmatpush1.bf16.msra.mxu0 %v477
    %519 = vmatprep.subr.bf16.mxu0 0
    %520 = vmatpush1.bf16.msra.mxu0 %v478
    %521 = vmatprep.subr.bf16.mxu0 0
    %522 = vmatpush1.bf16.msra.mxu0 %v479
    %523 = vmatprep.subr.bf16.mxu0 0
    %524 = vmatpush1.bf16.msra.mxu0 %v480
    %525 = vmatprep.subr.bf16.mxu0 0
    %526 = vmatpush1.bf16.msra.mxu0 %v481
    %527 = vmatprep.subr.bf16.mxu0 0
    %528 = vmatpush1.bf16.msra.mxu0 %v482
    %529 = vmatprep.subr.bf16.mxu0 0
    %530 = vmatpush1.bf16.msra.mxu0 %v483
    %531 = vmatprep.subr.bf16.mxu0 0
    %532 = vmatpush1.bf16.msra.mxu0 %v484
    %533 = vmatprep.mubr.bf16.mxu0 %v372
    %534 = vmatmul.mubr.bf16.gmra.mrb[0].mxu0 %v371
    %v535 = vpop.f32.mrb[0].mxu0
    %v536 = vadd.f32 0.0, %v535
    %v537 = vpop.f32.mrb[0].mxu0
    %v538 = vpop.f32.mrb[0].mxu0
    %v539 = vadd.f32 0.0, %v538
    %v540 = vpop.f32.mrb[0].mxu0
    %541 = vdwg.mxu0
    %p542 = scmp.eq.s32.totalorder 0, 0
    // Predicated region
    $region26: #{tpu_custom_call.1} parent=1 // pred_check
      %p543 = pneg %p542
    $region27: #{tpu_custom_call.1} parent=1 // pred_check_branch
      %545 = sbr.rel (%p543) target = $region29
    $region28: #{tpu_custom_call.1} parent=1 // pred_region
      %546 = vst [vmem:[#allocation2] sm:$0xff] %v536
      %547 = vst [vmem:[#allocation2 + $0x8] sm:$0xff] %v539
    $region29: #{tpu_custom_call.1} parent=1 // pred_fallthru
      _
    %p548 = scmp.gt.s32.totalorder 0, 0
    // Predicated region
    $region30: #{tpu_custom_call.1} parent=1 // pred_check
      %p549 = pneg %p548
    $region31: #{tpu_custom_call.1} parent=1 // pred_check_branch
      %551 = sbr.rel (%p549) target = $region33
    $region32: #{tpu_custom_call.1} parent=1 // pred_region
      %v552 = vld [vmem:[#allocation2] sm:$0xff]
      %v553 = vld [vmem:[#allocation2 + $0x8] sm:$0xff]
      %v554 = vadd.f32 %v552, %v536
      %v555 = vadd.f32 %v553, %v539
      %556 = vst [vmem:[#allocation2] sm:$0xff] %v554
      %557 = vst [vmem:[#allocation2 + $0x8] sm:$0xff] %v555
    $region33: #{tpu_custom_call.1} parent=1 // pred_fallthru
      _
    // Predicated region
    $region34: #{tpu_custom_call.1} parent=1 // pred_check
      %p558 = pneg %p542
    $region35: #{tpu_custom_call.1} parent=1 // pred_check_branch
      %560 = sbr.rel (%p558) target = $region37
    $region36: #{tpu_custom_call.1} parent=1 // pred_region
      %v561 = vld [vmem:[#allocation2] sm:$0xff]
      %v562 = vld [vmem:[#allocation2 + $0x8] sm:$0xff]
      %563 = vst [vmem:[#allocation9] sm:$0xff] %v561
      %564 = vst [vmem:[#allocation9 + $0x8] sm:$0xff] %v562
    $region37: #{tpu_custom_call.1} parent=1 // pred_fallthru
      _
    // Predicated region
    $region38: #{tpu_custom_call.1} parent=1 // pred_check
      _
    $region39: #{tpu_custom_call.1} parent=1 // pred_check_branch
      %566 = sbr.rel (0) target = $region41
    $region40: #{tpu_custom_call.1} parent=1 // pred_region
      %s568 = ssub.s32 256, 256
      %569 = vsyncadd [#allocation5], %s568
      %s570 = sshll.u32 [#allocation9], 4
      %s571 = int_to_ptr.vmem [resolvable:$true] %s570
      %576 = dma.vmem_to_hbm [thread:$0]  %s571, 256, %s3, [#allocation5], 128, 128, 8
    $region41: #{tpu_custom_call.1} parent=1 // pred_fallthru
      _
    // Predicated region
    $region42: #{tpu_custom_call.1} parent=1 // pred_check
      _
    $region43: #{tpu_custom_call.1} parent=1 // pred_check_branch
      %578 = sbr.rel (0) target = $region45
    $region44: #{tpu_custom_call.1} parent=1 // pred_region
      %579 = dma.done [#allocation5], 256
    $region45: #{tpu_custom_call.1} parent=1 // pred_fallthru
      _
    %580 = vsyncpa [#allocation4], 1
    %581 = vsyncpa [#allocation7], 1
    %582 = vsyncpa [#allocation5], 1

</llo_original>
